<compile_context>
chip_gen: v7x
topology: tpu7x:2x2x1
jax: 0.10.0
libtpu: 0.0.40
codegen_flags: <defaults>
</compile_context>

<pallas_src>
import functools

import jax
import jax.numpy as jnp
from jax.experimental import pallas as pl
from jax.experimental.pallas import tpu as pltpu


def _criss_cross_kernel(x_ref, wqkv_ref, bqkv_ref, wout_ref, bout_ref, out_ref,
                        *, num_channels, k_factor, attn_dtype):
    """One (TM, C*kf) token tile, fully lane-dense.

    x_ref    : (TM, C*kf)  f32   tokens, channel-major hidden layout
    wqkv_ref : (C*kf, 3*C*kf) bf16 fused block-diagonal QKV weight, [Q|K|V]
                                   column blocks, Q block pre-scaled by 1/sqrt(kf)
    bqkv_ref : (1, 3*C*kf) f32
    wout_ref : (C*kf, C*kf) bf16 block-diagonal repetition of fc_out weight^T
    bout_ref : (1, C*kf)   f32
    out_ref  : (TM, C*kf)  f32
    """
    C, kf = num_channels, k_factor
    CK = C * kf

    # --- fused QKV projection: one lane-dense MXU matmul (bf16 in, f32 acc) ---
    x_bf = x_ref[...].astype(wqkv_ref.dtype)
    qkv = jnp.dot(x_bf, wqkv_ref[...],
                  preferred_element_type=jnp.float32) + bqkv_ref[...]
    q = qkv[:, 0:CK].astype(attn_dtype)          # already scaled by 1/sqrt(kf)
    k = qkv[:, CK:2 * CK].astype(attn_dtype)
    v = qkv[:, 2 * CK:3 * CK].astype(attn_dtype)

    # --- criss-cross attention, lane-dense via XLU rolls ---
    # At lane-block i (query channel i), offset o pairs it with key channel
    # j = roll-partner of i; over o = 0..C-1 all key channels are covered.
    s_list = []
    s_max = None
    for o in range(C):
        k_rot = k if o == 0 else pltpu.roll(k, shift=o * kf, axis=1)
        s_o = q * k_rot                                    # (TM, CK), dense
        s_list.append(s_o)
        s_max = s_o if s_max is None else jnp.maximum(s_max, s_o)

    e_list = []
    d = None                                               # f32 denominator
    for o in range(C):
        e_o = jnp.exp(s_list[o] - s_max)                   # dense EUP exp
        e_list.append(e_o)
        e32 = e_o.astype(jnp.float32)
        d = e32 if d is None else d + e32

    inv = pl.reciprocal(d, approx=True)                    # one dense EUP recip

    # ctx[block m] = sum_i att[i, m] * v_i : scatter each offset's contribution
    # back to the key-channel block with the inverse roll.
    ctx = None                                             # f32 accumulator
    for o in range(C):
        contrib = (e_list[o] * v) * inv                    # -> f32
        back = contrib if o == 0 else pltpu.roll(contrib, shift=(C - o) * kf,
                                                 axis=1)
        ctx = back if ctx is None else ctx + back

    # --- fused fc_out: one lane-dense MXU matmul (bf16 in, f32 acc) ---
    out = jnp.dot(ctx.astype(wout_ref.dtype), wout_ref[...],
                  preferred_element_type=jnp.float32) + bout_ref[...]
    out_ref[...] = out.astype(out_ref.dtype)


def _block_diag(blocks):
    """(C, a, b) -> (C*a, C*b) block-diagonal (trace-time, tiny)."""
    C, a, b = blocks.shape
    eye = jnp.eye(C, dtype=blocks.dtype)
    return jnp.einsum('ij,iab->iajb', eye, blocks).reshape(C * a, C * b)


def _round_up(v, m):
    return ((v + m - 1) // m) * m


def _attn_elementwise_dtype():
    """bf16 elementwise attention only where the VPU/EUP are bf16-native."""
    try:
        kind = jax.devices()[0].device_kind.lower()
    except Exception:
        return jnp.float32
    if any(tag in kind for tag in ("v6", "v7", "7x")):
        return jnp.bfloat16
    return jnp.float32


@functools.partial(jax.jit, static_argnames=("k_factor", "in_channels"))
def criss_cross_mhsa(x, wqkv, bqkv, wout, bout, *, k_factor, in_channels):
    """x: (N, L, in_channels * k_factor) -> (N, L, in_channels * k_factor)."""
    N, L, H = x.shape
    C, kf = in_channels, k_factor
    CK = C * kf
    assert H == CK
    M = N * L
    scale = 1.0 / (float(kf) ** 0.5)

    # Fold the C per-channel QKV linears into one block-diagonal weight,
    # organized [Q_all | K_all | V_all]; fold 1/sqrt(kf) into the Q block.
    # Built in f32, cast to bf16 for the MXU. Biases stay f32.
    wq_t = jnp.transpose(wqkv[:, 0 * kf:1 * kf, :], (0, 2, 1))   # (C, in, out)
    wk_t = jnp.transpose(wqkv[:, 1 * kf:2 * kf, :], (0, 2, 1))
    wv_t = jnp.transpose(wqkv[:, 2 * kf:3 * kf, :], (0, 2, 1))
    w_fused = jnp.concatenate(
        [_block_diag(wq_t) * scale, _block_diag(wk_t), _block_diag(wv_t)],
        axis=1).astype(jnp.bfloat16)                              # (CK, 3*CK)
    b_fused = jnp.concatenate(
        [bqkv[:, 0 * kf:1 * kf].reshape(CK) * scale,
         bqkv[:, 1 * kf:2 * kf].reshape(CK),
         bqkv[:, 2 * kf:3 * kf].reshape(CK)]).reshape(1, 3 * CK)  # f32

    # fc_out applied per channel == block-diagonal repetition of wout^T.
    wout_big = _block_diag(
        jnp.broadcast_to(wout.T, (C, kf, kf))).astype(jnp.bfloat16)  # (CK, CK)
    bout_big = jnp.tile(bout, C).reshape(1, CK)                      # f32

    attn_dtype = _attn_elementwise_dtype()

    # Token tiling: no wrapper-side pad/slice; Pallas masks the ragged tail.
    TM_CAP = 1024
    if M >= 2 * TM_CAP:
        TM = TM_CAP
    elif M > 512:
        TM = _round_up(pl.cdiv(M, 2), 8)   # >= 2 tiles so v7x megacore shards
    elif M >= 8:
        TM = _round_up(M, 8)
    else:
        TM = M
    grid = (pl.cdiv(M, TM),)

    x2 = x.reshape(M, CK)

    kernel = functools.partial(_criss_cross_kernel, num_channels=C,
                               k_factor=kf, attn_dtype=attn_dtype)
    out = pl.pallas_call(
        kernel,
        out_shape=jax.ShapeDtypeStruct((M, CK), x.dtype),
        grid=grid,
        in_specs=[
            pl.BlockSpec((TM, CK), lambda i: (i, 0)),
            pl.BlockSpec((CK, 3 * CK), lambda i: (0, 0)),
            pl.BlockSpec((1, 3 * CK), lambda i: (0, 0)),
            pl.BlockSpec((CK, CK), lambda i: (0, 0)),
            pl.BlockSpec((1, CK), lambda i: (0, 0)),
        ],
        out_specs=pl.BlockSpec((TM, CK), lambda i: (i, 0)),
        compiler_params=pltpu.CompilerParams(
            dimension_semantics=("parallel",),
            # Sized for TM=1024 f32 intermediates + double-buffered I/O tiles;
            # stays well under v7x's 64 MiB physical VMEM.
            vmem_limit_bytes=48 * 1024 * 1024),
    )(x2, w_fused, b_fused, wout_big, bout_big)

    return out.reshape(N, L, CK)


def reference_jax(x, wqkv, bqkv, wout, bout, *, k_factor, in_channels):
    """Pure-JAX (f32) replica of the PyTorch forward for validation."""
    N, L, H = x.shape
    C, kf = in_channels, k_factor
    xc = x.reshape(N, L, C, kf)
    qkv = jnp.einsum('nlck,cok->nlco', xc, wqkv) + bqkv[None, None]   # (N,L,C,3kf)
    q, k, v = jnp.split(qkv, 3, axis=-1)                              # (N,L,C,kf)
    q = q.transpose(0, 1, 3, 2)   # (N,L,kf,C)  == torch.stack(..., -1)
    k = k.transpose(0, 1, 3, 2)
    v = v.transpose(0, 1, 3, 2)
    scores = q[..., :, None] * k[..., None, :] / (kf ** 0.5)          # (N,L,kf,C,C)
    att = jax.nn.softmax(scores, axis=-1)
    ctx = jnp.einsum('nldij,nldi->nldj', att, v)                      # (N,L,kf,C)
    ctx = ctx.transpose(0, 1, 3, 2)                                   # (N,L,C,kf)
    out = jnp.einsum('nlck,ok->nlco', ctx, wout) + bout
    return out.reshape(N, L, C * kf)


if __name__ == "__main__":
    # Small, forward-consistent shapes.
    N, L = 2, 8
    k_factor, in_channels = 32, 4

    key = jax.random.PRNGKey(0)
    kx, kw1, kb1, kw2, kb2 = jax.random.split(key, 5)

    x = jax.random.normal(kx, (N, L, in_channels * k_factor), jnp.float32)
    # Parameter shapes follow nn.Linear(k_factor, 3*k_factor) x C and
    # nn.Linear(k_factor, k_factor).
    wqkv = 0.1 * jax.random.normal(kw1, (in_channels, 3 * k_factor, k_factor), jnp.float32)
    bqkv = 0.1 * jax.random.normal(kb1, (in_channels, 3 * k_factor), jnp.float32)
    wout = 0.1 * jax.random.normal(kw2, (k_factor, k_factor), jnp.float32)
    bout = 0.1 * jax.random.normal(kb2, (k_factor,), jnp.float32)

    out = criss_cross_mhsa(x, wqkv, bqkv, wout, bout,
                           k_factor=k_factor, in_channels=in_channels)
    out = jax.block_until_ready(out)

    ref = reference_jax(x, wqkv, bqkv, wout, bout,
                        k_factor=k_factor, in_channels=in_channels)
    ref = jax.block_until_ready(ref)

    assert out.shape == (N, L, in_channels * k_factor)
    # Tolerance accounts for bf16 MXU operands (+ bf16 elementwise on v6e/v7x)
    # and the approx reciprocal in the softmax normalization.
    assert jnp.allclose(out, ref, rtol=2e-2, atol=2e-2), \
        f"max abs err {jnp.max(jnp.abs(out - ref))}"

    print("KERNEL_OK")
</pallas_src>

<mosaic_0001>
module attributes {stable_mosaic.version = 11 : i64} {
  func.func @_criss_cross_kernel(%arg0: i32, %arg1: memref<16x128xf32, #tpu.memory_space<vmem>>, %arg2: memref<128x384xbf16, #tpu.memory_space<vmem>>, %arg3: memref<1x384xf32, #tpu.memory_space<vmem>>, %arg4: memref<128x128xbf16, #tpu.memory_space<vmem>>, %arg5: memref<1x128xf32, #tpu.memory_space<vmem>>, %arg6: memref<16x128xf32, #tpu.memory_space<vmem>>) attributes {dimension_semantics = [#tpu.dimension_semantics<parallel>], iteration_bounds = array<i64: 1>, scalar_prefetch = 0 : i64, scratch_operands = 0 : i64, tpu.core_type = #tpu.core_type<tc>, window_params = [{transform_indices = @transform_0, window_bounds = array<i64: 16, 128>}, {pipeline_mode = #tpu.pipeline_mode<synchronous>, transform_indices = @transform_1, window_bounds = array<i64: 128, 384>}, {pipeline_mode = #tpu.pipeline_mode<synchronous>, transform_indices = @transform_2, window_bounds = array<i64: 1, 384>}, {pipeline_mode = #tpu.pipeline_mode<synchronous>, transform_indices = @transform_3, window_bounds = array<i64: 128, 128>}, {pipeline_mode = #tpu.pipeline_mode<synchronous>, transform_indices = @transform_4, window_bounds = array<i64: 1, 128>}, {transform_indices = @transform_5, window_bounds = array<i64: 16, 128>}]} {
    %c0 = arith.constant 0 : index
    %c0_0 = arith.constant 0 : index
    %0 = vector.load %arg1[%c0, %c0_0] : memref<16x128xf32, #tpu.memory_space<vmem>>, vector<16x128xf32>
    %1 = arith.truncf %0 : vector<16x128xf32> to vector<16x128xbf16>
    %c0_1 = arith.constant 0 : index
    %c0_2 = arith.constant 0 : index
    %2 = vector.load %arg2[%c0_1, %c0_2] : memref<128x384xbf16, #tpu.memory_space<vmem>>, vector<128x384xbf16>
    %cst = arith.constant dense<0.000000e+00> : vector<16x384xf32>
    %3 = tpu.matmul %1, %2, %cst {dimension_numbers = #tpu.dot_dimension_numbers<[1], [0], [0], [1], [0, 0, 1, 1], [], []>} : vector<16x128xbf16>, vector<128x384xbf16>, vector<16x384xf32> -> vector<16x384xf32>
    %c0_3 = arith.constant 0 : index
    %c0_4 = arith.constant 0 : index
    %4 = vector.load %arg3[%c0_3, %c0_4] : memref<1x384xf32, #tpu.memory_space<vmem>>, vector<1x384xf32>
    %5 = vector.broadcast %4 : vector<1x384xf32> to vector<16x384xf32>
    %6 = arith.addf %3, %5 : vector<16x384xf32>
    %7 = vector.extract_strided_slice %6 {offsets = [0, 0], sizes = [16, 128], strides = [1, 1]} : vector<16x384xf32> to vector<16x128xf32>
    %8 = vector.extract_strided_slice %6 {offsets = [0, 128], sizes = [16, 128], strides = [1, 1]} : vector<16x384xf32> to vector<16x128xf32>
    %9 = vector.extract_strided_slice %6 {offsets = [0, 256], sizes = [16, 128], strides = [1, 1]} : vector<16x384xf32> to vector<16x128xf32>
    %10 = arith.mulf %7, %8 : vector<16x128xf32>
    %c32_i32 = arith.constant 32 : i32
    %11 = tpu.dynamic_rotate %8 by %c32_i32 dim 1 : vector<16x128xf32>, i32 -> vector<16x128xf32>
    %12 = arith.mulf %7, %11 : vector<16x128xf32>
    %13 = arith.maximumf %10, %12 : vector<16x128xf32>
    %c64_i32 = arith.constant 64 : i32
    %14 = tpu.dynamic_rotate %8 by %c64_i32 dim 1 : vector<16x128xf32>, i32 -> vector<16x128xf32>
    %15 = arith.mulf %7, %14 : vector<16x128xf32>
    %16 = arith.maximumf %13, %15 : vector<16x128xf32>
    %c96_i32 = arith.constant 96 : i32
    %17 = tpu.dynamic_rotate %8 by %c96_i32 dim 1 : vector<16x128xf32>, i32 -> vector<16x128xf32>
    %18 = arith.mulf %7, %17 : vector<16x128xf32>
    %19 = arith.maximumf %16, %18 : vector<16x128xf32>
    %20 = arith.subf %10, %19 : vector<16x128xf32>
    %21 = math.exp %20 : vector<16x128xf32>
    %22 = arith.subf %12, %19 : vector<16x128xf32>
    %23 = math.exp %22 : vector<16x128xf32>
    %24 = arith.addf %21, %23 : vector<16x128xf32>
    %25 = arith.subf %15, %19 : vector<16x128xf32>
    %26 = math.exp %25 : vector<16x128xf32>
    %27 = arith.addf %24, %26 : vector<16x128xf32>
    %28 = arith.subf %18, %19 : vector<16x128xf32>
    %29 = math.exp %28 : vector<16x128xf32>
    %30 = arith.addf %27, %29 : vector<16x128xf32>
    %31 = tpu.reciprocal %30 {approx = true} : vector<16x128xf32> -> vector<16x128xf32>
    %32 = arith.mulf %21, %9 : vector<16x128xf32>
    %33 = arith.mulf %32, %31 : vector<16x128xf32>
    %34 = arith.mulf %23, %9 : vector<16x128xf32>
    %35 = arith.mulf %34, %31 : vector<16x128xf32>
    %c96_i32_5 = arith.constant 96 : i32
    %36 = tpu.dynamic_rotate %35 by %c96_i32_5 dim 1 : vector<16x128xf32>, i32 -> vector<16x128xf32>
    %37 = arith.addf %33, %36 : vector<16x128xf32>
    %38 = arith.mulf %26, %9 : vector<16x128xf32>
    %39 = arith.mulf %38, %31 : vector<16x128xf32>
    %c64_i32_6 = arith.constant 64 : i32
    %40 = tpu.dynamic_rotate %39 by %c64_i32_6 dim 1 : vector<16x128xf32>, i32 -> vector<16x128xf32>
    %41 = arith.addf %37, %40 : vector<16x128xf32>
    %42 = arith.mulf %29, %9 : vector<16x128xf32>
    %43 = arith.mulf %42, %31 : vector<16x128xf32>
    %c32_i32_7 = arith.constant 32 : i32
    %44 = tpu.dynamic_rotate %43 by %c32_i32_7 dim 1 : vector<16x128xf32>, i32 -> vector<16x128xf32>
    %45 = arith.addf %41, %44 : vector<16x128xf32>
    %46 = arith.truncf %45 : vector<16x128xf32> to vector<16x128xbf16>
    %c0_8 = arith.constant 0 : index
    %c0_9 = arith.constant 0 : index
    %47 = vector.load %arg4[%c0_8, %c0_9] : memref<128x128xbf16, #tpu.memory_space<vmem>>, vector<128x128xbf16>
    %cst_10 = arith.constant dense<0.000000e+00> : vector<16x128xf32>
    %48 = tpu.matmul %46, %47, %cst_10 {dimension_numbers = #tpu.dot_dimension_numbers<[1], [0], [0], [1], [0, 0, 1, 1], [], []>} : vector<16x128xbf16>, vector<128x128xbf16>, vector<16x128xf32> -> vector<16x128xf32>
    %c0_11 = arith.constant 0 : index
    %c0_12 = arith.constant 0 : index
    %49 = vector.load %arg5[%c0_11, %c0_12] : memref<1x128xf32, #tpu.memory_space<vmem>>, vector<1x128xf32>
    %50 = vector.broadcast %49 : vector<1x128xf32> to vector<16x128xf32>
    %51 = arith.addf %48, %50 : vector<16x128xf32>
    %c0_13 = arith.constant 0 : index
    %c0_14 = arith.constant 0 : index
    %52 = vector.load %arg6[%c0_13, %c0_14] : memref<16x128xf32, #tpu.memory_space<vmem>>, vector<16x128xf32>
    tpu.vector_store %arg6[%c0_13, %c0_14], %51 {strides = array<i32>} : memref<16x128xf32, #tpu.memory_space<vmem>>, vector<16x128xf32>,
    return
  }
  func.func @transform_0(%arg0: i32) -> (i32, i32) {
    %c0_i32 = arith.constant 0 : i32
    %c0_i32_0 = arith.constant 0 : i32
    return %arg0, %c0_i32 : i32, i32
  }
  func.func @transform_1(%arg0: i32) -> (i32, i32) {
    %c0_i32 = arith.constant 0 : i32
    %c0_i32_0 = arith.constant 0 : i32
    %c0_i32_1 = arith.constant 0 : i32
    return %c0_i32, %c0_i32_0 : i32, i32
  }
  func.func @transform_2(%arg0: i32) -> (i32, i32) {
    %c0_i32 = arith.constant 0 : i32
    %c0_i32_0 = arith.constant 0 : i32
    %c0_i32_1 = arith.constant 0 : i32
    return %c0_i32, %c0_i32_0 : i32, i32
  }
  func.func @transform_3(%arg0: i32) -> (i32, i32) {
    %c0_i32 = arith.constant 0 : i32
    %c0_i32_0 = arith.constant 0 : i32
    %c0_i32_1 = arith.constant 0 : i32
    return %c0_i32, %c0_i32_0 : i32, i32
  }
  func.func @transform_4(%arg0: i32) -> (i32, i32) {
    %c0_i32 = arith.constant 0 : i32
    %c0_i32_0 = arith.constant 0 : i32
    %c0_i32_1 = arith.constant 0 : i32
    return %c0_i32, %c0_i32_0 : i32, i32
  }
  func.func @transform_5(%arg0: i32) -> (i32, i32) {
    %c0_i32 = arith.constant 0 : i32
    %c0_i32_0 = arith.constant 0 : i32
    return %arg0, %c0_i32 : i32, i32
  }
}

</mosaic_0001>

<llo_original>
// kernel: tile.8
$region0: #{tile.8}
  #allocation0 [shape = 's32[1]{0}', space=sflag, size = 0x4, scoped, tag = 'scoped memory for tile.8']
  %s0 = inlined_call_operand.vmem [shape: f32[32], index: 0, kind: input, shape index: {}]
  %s1 = inlined_call_operand.vmem [shape: f32[4,32], index: 1, kind: output, shape index: {}]
  // Predicated region
  $region2: #{tile.8} parent=0 // pred_check
    _
  $region3: #{tile.8} parent=0 // pred_check_branch
    %3 = sbr.rel (0) target = $region5
  $region4: #{tile.8} parent=0 // pred_region
    _
  $region5: #{tile.8} parent=0 // pred_fallthru
    _
  %v4 = vld [vmem:[%s0] ss:$0 sm:$0xff]
  %5 = vst [vmem:[%s1] sm:$0xf] %v4

// kernel: tile.9
$region0: #{tile.9}
  %s0 = inlined_call_operand.vmem [shape: f32[4,32], index: 0, kind: input, shape index: {}]
  %s1 = inlined_call_operand.vmem [shape: f32[1,128], index: 1, kind: output, shape index: {}]
  $region1: #{tile.9} parent=0
    #allocation0 [shape = 'u8[4096]{0}', space=vmem, size = 0x1000, scoped, tag = 'scoped mem for output reshape']
    #allocation1 [shape = 'u8[4096]{0}', space=vmem, size = 0x1000, scoped, tag = 'scoped mem for input reshape']
    %s3 = sshllo.u32 0, 4
    %v4 = vld [vmem:[%s0] sm:%s3]
    %5 = vst [vmem:[#allocation1] sm:%s3] %v4
    %v6 = vld [vmem:[#allocation1] sm:$0x1]
    %vm7 = vcmask 261120
    %8 = vst.msk [vmem:[#allocation0] sm:$0x1] %vm7, %v6
    %s9 = scalar_lea.vmem [#allocation1], 3
    %v10 = vld [vmem:[%s9] sm:$0x1]
    %11 = vrot.lane.b32.xlu0 %v10, 96
    %v12 = vpop.permute.xlu0 %11
    %vm13 = vcmask 1048320
    %14 = vst.msk [vmem:[#allocation0] sm:$0x1] %vm13, %v12
    %s15 = scalar_lea.vmem [#allocation1], 2
    %v16 = vld [vmem:[%s15] sm:$0x1]
    %17 = vrot.lane.b32.xlu0 %v16, 64
    %v18 = vpop.permute.xlu0 %17
    %vm19 = vcmask 785920
    %20 = vst.msk [vmem:[#allocation0] sm:$0x1] %vm19, %v18
    %s21 = scalar_lea.vmem [#allocation1], 1
    %v22 = vld [vmem:[%s21] sm:$0x1]
    %23 = vrot.lane.b32.xlu0 %v22, 32
    %v24 = vpop.permute.xlu0 %23
    %vm25 = vcmask 523520
    %26 = vst.msk [vmem:[#allocation0] sm:$0x1] %vm25, %v24
    %s28 = sshllo.u32 0, 1
    %v30 = vld [vmem:[#allocation0] sm:%s28]
    %s31 = sshllo.u32 0, 1
    %32 = vst [vmem:[%s1] sm:%s31] %v30

// kernel: criss_cross_mhsa.1
$region0: #{criss_cross_mhsa.1}
  #allocation0 [shape = 'u32[]', space=smem, size = 0x4, offset = 0x4, fixed_abs, tag = 'smem constant byte address 0x4 - core index']
  #allocation1 [shape = 'u32[144,128]{1,0:T(1,128)}', space=vmem, size = 0x12000, scoped, tag = 'internal scratch']
  %s0 = inlined_call_operand.vmem [shape: f32[16,128], index: 0, kind: input, shape index: {}]
  %s1 = inlined_call_operand.vmem [shape: bf16[128,384], index: 1, kind: input, shape index: {}]
  %s2 = inlined_call_operand.vmem [shape: f32[1,384], index: 2, kind: input, shape index: {}]
  %s3 = inlined_call_operand.vmem [shape: bf16[128,128], index: 3, kind: input, shape index: {}]
  %s4 = inlined_call_operand.vmem [shape: f32[1,128], index: 4, kind: input, shape index: {}]
  %s5 = inlined_call_operand.hbm [shape: f32[16,128], index: 5, kind: output, shape index: {}]
  %s6 = sld [smem:[#allocation0]]
  $region30: #{criss_cross_mhsa.1} parent=0
    _
  %s8 = ssub.s32 1, %s6
  %s9 = scalar_select 0, %s8, %s6
  $region1: #{criss_cross_mhsa.1} parent=0
    #allocation2 [shape = 'u8[8192]{0}', space=vmem, size = 0x2000, scoped, tag = 'output window, operand 0, single buffered']
    #allocation3 [shape = 's32[1]{0}', space=sflag, size = 0x4, scoped, tag = 'scoped memory for criss_cross_mhsa.1']
    %10 = vsyncpa [#allocation3], 0
    // Predicated region
    $region2: #{criss_cross_mhsa.1} parent=1 // pred_check
      _
    $region3: #{criss_cross_mhsa.1} parent=1 // pred_check_branch
      %12 = sbr.rel (0) target = $region5
    $region4: #{criss_cross_mhsa.1} parent=1 // pred_region
      _
    $region5: #{criss_cross_mhsa.1} parent=1 // pred_fallthru
      _
    // Predicated region
    $region6: #{criss_cross_mhsa.1} parent=1 // pred_check
      _
    $region7: #{criss_cross_mhsa.1} parent=1 // pred_check_branch
      %14 = sbr.rel (0) target = $region9
    $region8: #{criss_cross_mhsa.1} parent=1 // pred_region
      _
    $region9: #{criss_cross_mhsa.1} parent=1 // pred_fallthru
      _
    // Predicated region
    $region10: #{criss_cross_mhsa.1} parent=1 // pred_check
      _
    $region11: #{criss_cross_mhsa.1} parent=1 // pred_check_branch
      %16 = sbr.rel (0) target = $region13
    $region12: #{criss_cross_mhsa.1} parent=1 // pred_region
      _
    $region13: #{criss_cross_mhsa.1} parent=1 // pred_fallthru
      _
    // Predicated region
    $region14: #{criss_cross_mhsa.1} parent=1 // pred_check
      _
    $region15: #{criss_cross_mhsa.1} parent=1 // pred_check_branch
      %18 = sbr.rel (0) target = $region17
    $region16: #{criss_cross_mhsa.1} parent=1 // pred_region
      _
    $region17: #{criss_cross_mhsa.1} parent=1 // pred_fallthru
      _
    // Predicated region
    $region18: #{criss_cross_mhsa.1} parent=1 // pred_check
      _
    $region19: #{criss_cross_mhsa.1} parent=1 // pred_check_branch
      %20 = sbr.rel (0) target = $region21
    $region20: #{criss_cross_mhsa.1} parent=1 // pred_region
      _
    $region21: #{criss_cross_mhsa.1} parent=1 // pred_fallthru
      _
    %v22 = vld [vmem:[%s0] sm:$0xff]
    %v23 = vld [vmem:[%s0 + $0x8] sm:$0xff]
    %v24 = vpack.c.bf16 %v23, %v22
    %v25 = vld [vmem:[%s1] sm:$0xff]
    %v26 = vld [vmem:[%s1 + $0x8] sm:$0xf]
    %v27 = vld [vmem:[%s1 + $0xc] sm:$0xff]
    %v28 = vld [vmem:[%s1 + $0x14] sm:$0xf]
    %v29 = vld [vmem:[%s1 + $0x18] sm:$0xff]
    %v30 = vld [vmem:[%s1 + $0x20] sm:$0xf]
    %v31 = vld [vmem:[%s1 + $0x24] sm:$0xff]
    %v32 = vld [vmem:[%s1 + $0x2c] sm:$0xf]
    %v33 = vld [vmem:[%s1 + $0x30] sm:$0xff]
    %v34 = vld [vmem:[%s1 + $0x38] sm:$0xf]
    %v35 = vld [vmem:[%s1 + $0x3c] sm:$0xff]
    %v36 = vld [vmem:[%s1 + $0x44] sm:$0xf]
    %v37 = vld [vmem:[%s1 + $0x48] sm:$0xff]
    %v38 = vld [vmem:[%s1 + $0x50] sm:$0xf]
    %v39 = vld [vmem:[%s1 + $0x54] sm:$0xff]
    %v40 = vld [vmem:[%s1 + $0x5c] sm:$0xf]
    %v41 = vld [vmem:[%s1 + $0x60] sm:$0xff]
    %v42 = vld [vmem:[%s1 + $0x68] sm:$0xf]
    %v43 = vld [vmem:[%s1 + $0x6c] sm:$0xff]
    %v44 = vld [vmem:[%s1 + $0x74] sm:$0xf]
    %v45 = vld [vmem:[%s1 + $0x78] sm:$0xff]
    %v46 = vld [vmem:[%s1 + $0x80] sm:$0xf]
    %v47 = vld [vmem:[%s1 + $0x84] sm:$0xff]
    %v48 = vld [vmem:[%s1 + $0x8c] sm:$0xf]
    %v49 = vld [vmem:[%s1 + $0x90] sm:$0xff]
    %v50 = vld [vmem:[%s1 + $0x98] sm:$0xf]
    %v51 = vld [vmem:[%s1 + $0x9c] sm:$0xff]
    %v52 = vld [vmem:[%s1 + $0xa4] sm:$0xf]
    %v53 = vld [vmem:[%s1 + $0xa8] sm:$0xff]
    %v54 = vld [vmem:[%s1 + $0xb0] sm:$0xf]
    %v55 = vld [vmem:[%s1 + $0xb4] sm:$0xff]
    %v56 = vld [vmem:[%s1 + $0xbc] sm:$0xf]
    %v57 = vld [vmem:[%s2] sm:$0x7]
    %v59 = vlaneseq
    %v60 = vshrl.u32 %v59, 7
    %v61 = vsub.s32 0, %v60
    %v62 = vrot.slane %v57, %v61
    %v63 = vlaneseq
    %v64 = vshrl.u32 %v63, 7
    %v65 = vsub.s32 1, %v64
    %v66 = vrot.slane %v57, %v65
    %v67 = vlaneseq
    %v68 = vshrl.u32 %v67, 7
    %v69 = vsub.s32 2, %v68
    %v70 = vrot.slane %v57, %v69
    %v106 = vunpack.c.l.b16 %v25
    %v107 = vunpack.c.h.b16 %v25
    %v108 = vunpack.c.l.b16 %v26
    %v109 = vunpack.c.l.b16 %v27
    %v110 = vunpack.c.h.b16 %v27
    %v111 = vunpack.c.l.b16 %v28
    %v112 = vunpack.c.l.b16 %v29
    %v113 = vunpack.c.h.b16 %v29
    %v114 = vunpack.c.l.b16 %v30
    %v115 = vunpack.c.l.b16 %v31
    %v116 = vunpack.c.h.b16 %v31
    %v117 = vunpack.c.l.b16 %v32
    %v118 = vunpack.c.l.b16 %v33
    %v119 = vunpack.c.h.b16 %v33
    %v120 = vunpack.c.l.b16 %v34
    %v121 = vunpack.c.l.b16 %v35
    %v122 = vunpack.c.h.b16 %v35
    %v123 = vunpack.c.l.b16 %v36
    %v124 = vunpack.c.l.b16 %v37
    %v125 = vunpack.c.h.b16 %v37
    %v126 = vunpack.c.l.b16 %v38
    %v127 = vunpack.c.l.b16 %v39
    %v128 = vunpack.c.h.b16 %v39
    %v129 = vunpack.c.l.b16 %v40
    %v130 = vunpack.c.l.b16 %v41
    %v131 = vunpack.c.h.b16 %v41
    %v132 = vunpack.c.l.b16 %v42
    %v133 = vunpack.c.l.b16 %v43
    %v134 = vunpack.c.h.b16 %v43
    %v135 = vunpack.c.l.b16 %v44
    %v136 = vunpack.c.l.b16 %v45
    %v137 = vunpack.c.h.b16 %v45
    %v138 = vunpack.c.l.b16 %v46
    %v139 = vunpack.c.l.b16 %v47
    %v140 = vunpack.c.h.b16 %v47
    %v141 = vunpack.c.l.b16 %v48
    %v142 = vunpack.c.l.b16 %v49
    %v143 = vunpack.c.h.b16 %v49
    %v144 = vunpack.c.l.b16 %v50
    %v145 = vunpack.c.l.b16 %v51
    %v146 = vunpack.c.h.b16 %v51
    %v147 = vunpack.c.l.b16 %v52
    %v148 = vunpack.c.l.b16 %v53
    %v149 = vunpack.c.h.b16 %v53
    %v150 = vunpack.c.l.b16 %v54
    %v151 = vunpack.c.l.b16 %v55
    %v152 = vunpack.c.h.b16 %v55
    %v153 = vunpack.c.l.b16 %v56
    %v154 = vpack.c.b16 %v109, %v106
    %v155 = vpack.c.b16 %v110, %v107
    %v156 = vpack.c.b16 %v111, %v108
    %v157 = vpack.c.b16 %v115, %v112
    %v158 = vpack.c.b16 %v116, %v113
    %v159 = vpack.c.b16 %v117, %v114
    %v160 = vpack.c.b16 %v121, %v118
    %v161 = vpack.c.b16 %v122, %v119
    %v162 = vpack.c.b16 %v123, %v120
    %v163 = vpack.c.b16 %v127, %v124
    %v164 = vpack.c.b16 %v128, %v125
    %v165 = vpack.c.b16 %v129, %v126
    %v166 = vpack.c.b16 %v133, %v130
    %v167 = vpack.c.b16 %v134, %v131
    %v168 = vpack.c.b16 %v135, %v132
    %v169 = vpack.c.b16 %v139, %v136
    %v170 = vpack.c.b16 %v140, %v137
    %v171 = vpack.c.b16 %v141, %v138
    %v172 = vpack.c.b16 %v145, %v142
    %v173 = vpack.c.b16 %v146, %v143
    %v174 = vpack.c.b16 %v147, %v144
    %v175 = vpack.c.b16 %v151, %v148
    %v176 = vpack.c.b16 %v152, %v149
    %v177 = vpack.c.b16 %v153, %v150
    %202 = vmatprep.subr.bf16.mxu0 %v155
    %203 = vmatpush1.bf16.msra.mxu0 %v154
    %204 = vmatprep.subr.bf16.mxu0 %v158
    %205 = vmatpush1.bf16.msra.mxu0 %v157
    %206 = vmatprep.subr.bf16.mxu0 %v161
    %207 = vmatpush1.bf16.msra.mxu0 %v160
    %208 = vmatprep.subr.bf16.mxu0 %v164
    %209 = vmatpush1.bf16.msra.mxu0 %v163
    %210 = vmatprep.subr.bf16.mxu0 %v167
    %211 = vmatpush1.bf16.msra.mxu0 %v166
    %212 = vmatprep.subr.bf16.mxu0 %v170
    %213 = vmatpush1.bf16.msra.mxu0 %v169
    %214 = vmatprep.subr.bf16.mxu0 %v173
    %215 = vmatpush1.bf16.msra.mxu0 %v172
    %216 = vmatprep.subr.bf16.mxu0 %v176
    %217 = vmatpush1.bf16.msra.mxu0 %v175
    %218 = vmatprep.subr.bf16.mxu0 0
    %219 = vmatpush1.bf16.msra.mxu0 0
    %220 = vmatprep.subr.bf16.mxu0 0
    %221 = vmatpush1.bf16.msra.mxu0 0
    %222 = vmatprep.subr.bf16.mxu0 0
    %223 = vmatpush1.bf16.msra.mxu0 0
    %224 = vmatprep.subr.bf16.mxu0 0
    %225 = vmatpush1.bf16.msra.mxu0 0
    %226 = vmatprep.subr.bf16.mxu0 0
    %227 = vmatpush1.bf16.msra.mxu0 0
    %228 = vmatprep.subr.bf16.mxu0 0
    %229 = vmatpush1.bf16.msra.mxu0 0
    %230 = vmatprep.subr.bf16.mxu0 0
    %231 = vmatpush1.bf16.msra.mxu0 0
    %232 = vmatprep.subr.bf16.mxu0 0
    %233 = vmatpush1.bf16.msra.mxu0 0
    %234 = vmatprep.mubr.bf16.mxu0 0
    %235 = vmatmul.mubr.bf16.gmra.mrb[0].mxu0 %v24
    %v236 = vpop.f32.mrb[0].mxu0
    %v237 = vadd.f32 %v62, %v236
    %v238 = vpop.f32.mrb[0].mxu0
    %v239 = vadd.f32 %v66, %v238
    %v240 = vpop.f32.mrb[0].mxu0
    %v241 = vadd.f32 %v62, %v240
    %v242 = vpop.f32.mrb[0].mxu0
    %v243 = vadd.f32 %v66, %v242
    %244 = vdwg.mxu0
    %245 = vmatprep.subr.bf16.mxu0 0
    %246 = vmatpush1.bf16.msra.mxu0 %v156
    %247 = vmatprep.subr.bf16.mxu0 0
    %248 = vmatpush1.bf16.msra.mxu0 %v159
    %249 = vmatprep.subr.bf16.mxu0 0
    %250 = vmatpush1.bf16.msra.mxu0 %v162
    %251 = vmatprep.subr.bf16.mxu0 0
    %252 = vmatpush1.bf16.msra.mxu0 %v165
    %253 = vmatprep.subr.bf16.mxu0 0
    %254 = vmatpush1.bf16.msra.mxu0 %v168
    %255 = vmatprep.subr.bf16.mxu0 0
    %256 = vmatpush1.bf16.msra.mxu0 %v171
    %257 = vmatprep.subr.bf16.mxu0 0
    %258 = vmatpush1.bf16.msra.mxu0 %v174
    %259 = vmatprep.subr.bf16.mxu0 0
    %260 = vmatpush1.bf16.msra.mxu0 %v177
    %261 = vmatprep.subr.bf16.mxu0 0
    %262 = vmatpush1.bf16.msra.mxu0 0
    %263 = vmatprep.subr.bf16.mxu0 0
    %264 = vmatpush1.bf16.msra.mxu0 0
    %265 = vmatprep.subr.bf16.mxu0 0
    %266 = vmatpush1.bf16.msra.mxu0 0
    %267 = vmatprep.subr.bf16.mxu0 0
    %268 = vmatpush1.bf16.msra.mxu0 0
    %269 = vmatprep.subr.bf16.mxu0 0
    %270 = vmatpush1.bf16.msra.mxu0 0
    %271 = vmatprep.subr.bf16.mxu0 0
    %272 = vmatpush1.bf16.msra.mxu0 0
    %273 = vmatprep.subr.bf16.mxu0 0
    %274 = vmatpush1.bf16.msra.mxu0 0
    %275 = vmatprep.subr.bf16.mxu0 0
    %276 = vmatpush1.bf16.msra.mxu0 0
    %277 = vmatprep.mubr.bf16.mxu0 0
    %278 = vmatmul.mubr.bf16.gmra.mrb[0].mxu0 %v24
    %v279 = vpop.f32.mrb[0].mxu0
    %v280 = vadd.f32 %v70, %v279
    %v281 = vpop.f32.mrb[0].mxu0
    %v282 = vpop.f32.mrb[0].mxu0
    %v283 = vadd.f32 %v70, %v282
    %v284 = vpop.f32.mrb[0].mxu0
    %285 = vdwg.mxu0
    %v286 = vmul.f32 %v237, %v239
    %v287 = vmul.f32 %v241, %v243
    %288 = vrot.lane.b32.xlu0 %v239, 32
    %v289 = vpop.permute.xlu0 %288
    %290 = vrot.lane.b32.xlu0 %v243, 32
    %v291 = vpop.permute.xlu0 %290
    %v292 = vmul.f32 %v237, %v289
    %v293 = vmul.f32 %v241, %v291
    %v294 = vmax.f32 %v286, %v292
    %v295 = vmax.f32 %v287, %v293
    %296 = vrot.lane.b32.xlu0 %v239, 64
    %v297 = vpop.permute.xlu0 %296
    %298 = vrot.lane.b32.xlu0 %v243, 64
    %v299 = vpop.permute.xlu0 %298
    %v300 = vmul.f32 %v237, %v297
    %v301 = vmul.f32 %v241, %v299
    %v302 = vmax.f32 %v294, %v300
    %v303 = vmax.f32 %v295, %v301
    %304 = vrot.lane.b32.xlu0 %v239, 96
    %v305 = vpop.permute.xlu0 %304
    %306 = vrot.lane.b32.xlu0 %v243, 96
    %v307 = vpop.permute.xlu0 %306
    %v308 = vmul.f32 %v237, %v305
    %v309 = vmul.f32 %v241, %v307
    %v310 = vmax.f32 %v302, %v308
    %v311 = vmax.f32 %v303, %v309
    %v312 = vsub.f32 %v286, %v310
    %v313 = vsub.f32 %v287, %v311
    %v314 = vmul.f32 %v312, 1.442695
    %v315 = vpow.pop %v314
    %v316 = vmul.f32 %v313, 1.442695
    %v317 = vpow.pop %v316
    %v318 = vsub.f32 %v292, %v310
    %v319 = vsub.f32 %v293, %v311
    %v320 = vmul.f32 %v318, 1.442695
    %v321 = vpow.pop %v320
    %v322 = vmul.f32 %v319, 1.442695
    %v323 = vpow.pop %v322
    %v324 = vadd.f32 %v315, %v321
    %v325 = vadd.f32 %v317, %v323
    %v326 = vsub.f32 %v300, %v310
    %v327 = vsub.f32 %v301, %v311
    %v328 = vmul.f32 %v326, 1.442695
    %v329 = vpow.pop %v328
    %v330 = vmul.f32 %v327, 1.442695
    %v331 = vpow.pop %v330
    %v332 = vadd.f32 %v324, %v329
    %v333 = vadd.f32 %v325, %v331
    %v334 = vsub.f32 %v308, %v310
    %v335 = vsub.f32 %v309, %v311
    %v336 = vmul.f32 %v334, 1.442695
    %v337 = vpow.pop %v336
    %v338 = vmul.f32 %v335, 1.442695
    %v339 = vpow.pop %v338
    %v340 = vadd.f32 %v332, %v337
    %v341 = vadd.f32 %v333, %v339
    %v342 = vrcp.pop %v340
    %v343 = vrcp.pop %v341
    %v344 = vmul.f32 %v315, %v280
    %v345 = vmul.f32 %v317, %v283
    %v346 = vmul.f32 %v344, %v342
    %v347 = vmul.f32 %v345, %v343
    %v348 = vmul.f32 %v321, %v280
    %v349 = vmul.f32 %v323, %v283
    %v350 = vmul.f32 %v348, %v342
    %v351 = vmul.f32 %v349, %v343
    %352 = vrot.lane.b32.xlu0 %v350, 96
    %v353 = vpop.permute.xlu0 %352
    %354 = vrot.lane.b32.xlu0 %v351, 96
    %v355 = vpop.permute.xlu0 %354
    %v356 = vadd.f32 %v346, %v353
    %v357 = vadd.f32 %v347, %v355
    %v358 = vmul.f32 %v329, %v280
    %v359 = vmul.f32 %v331, %v283
    %v360 = vmul.f32 %v358, %v342
    %v361 = vmul.f32 %v359, %v343
    %362 = vrot.lane.b32.xlu0 %v360, 64
    %v363 = vpop.permute.xlu0 %362
    %364 = vrot.lane.b32.xlu0 %v361, 64
    %v365 = vpop.permute.xlu0 %364
    %v366 = vadd.f32 %v356, %v363
    %v367 = vadd.f32 %v357, %v365
    %v368 = vmul.f32 %v337, %v280
    %v369 = vmul.f32 %v339, %v283
    %v370 = vmul.f32 %v368, %v342
    %v371 = vmul.f32 %v369, %v343
    %372 = vrot.lane.b32.xlu0 %v370, 32
    %v373 = vpop.permute.xlu0 %372
    %374 = vrot.lane.b32.xlu0 %v371, 32
    %v375 = vpop.permute.xlu0 %374
    %v376 = vadd.f32 %v366, %v373
    %v377 = vadd.f32 %v367, %v375
    %v378 = vpack.c.bf16 %v377, %v376
    %v379 = vld [vmem:[%s3] sm:$0xf]
    %v380 = vld [vmem:[%s3 + $0x4] sm:$0xf]
    %v381 = vld [vmem:[%s3 + $0x8] sm:$0xf]
    %v382 = vld [vmem:[%s3 + $0xc] sm:$0xf]
    %v383 = vld [vmem:[%s3 + $0x10] sm:$0xf]
    %v384 = vld [vmem:[%s3 + $0x14] sm:$0xf]
    %v385 = vld [vmem:[%s3 + $0x18] sm:$0xf]
    %v386 = vld [vmem:[%s3 + $0x1c] sm:$0xf]
    %v387 = vld [vmem:[%s3 + $0x20] sm:$0xf]
    %v388 = vld [vmem:[%s3 + $0x24] sm:$0xf]
    %v389 = vld [vmem:[%s3 + $0x28] sm:$0xf]
    %v390 = vld [vmem:[%s3 + $0x2c] sm:$0xf]
    %v391 = vld [vmem:[%s3 + $0x30] sm:$0xf]
    %v392 = vld [vmem:[%s3 + $0x34] sm:$0xf]
    %v393 = vld [vmem:[%s3 + $0x38] sm:$0xf]
    %v394 = vld [vmem:[%s3 + $0x3c] sm:$0xf]
    %v395 = vld [vmem:[%s4] sm:$0x1]
    %v397 = vlaneseq
    %v398 = vshrl.u32 %v397, 7
    %v399 = vsub.s32 0, %v398
    %v400 = vrot.slane %v395, %v399
    %v418 = vunpack.c.l.b16 %v379
    %v419 = vunpack.c.l.b16 %v380
    %v420 = vunpack.c.l.b16 %v381
    %v421 = vunpack.c.l.b16 %v382
    %v422 = vunpack.c.l.b16 %v383
    %v423 = vunpack.c.l.b16 %v384
    %v424 = vunpack.c.l.b16 %v385
    %v425 = vunpack.c.l.b16 %v386
    %v426 = vunpack.c.l.b16 %v387
    %v427 = vunpack.c.l.b16 %v388
    %v428 = vunpack.c.l.b16 %v389
    %v429 = vunpack.c.l.b16 %v390
    %v430 = vunpack.c.l.b16 %v391
    %v431 = vunpack.c.l.b16 %v392
    %v432 = vunpack.c.l.b16 %v393
    %v433 = vunpack.c.l.b16 %v394
    %v434 = vpack.c.b16 %v419, %v418
    %v435 = vpack.c.b16 %v421, %v420
    %v436 = vpack.c.b16 %v423, %v422
    %v437 = vpack.c.b16 %v425, %v424
    %v438 = vpack.c.b16 %v427, %v426
    %v439 = vpack.c.b16 %v429, %v428
    %v440 = vpack.c.b16 %v431, %v430
    %v441 = vpack.c.b16 %v433, %v432
    %450 = vmatprep.subr.bf16.mxu0 0
    %451 = vmatpush1.bf16.msra.mxu0 %v434
    %452 = vmatprep.subr.bf16.mxu0 0
    %453 = vmatpush1.bf16.msra.mxu0 %v435
    %454 = vmatprep.subr.bf16.mxu0 0
    %455 = vmatpush1.bf16.msra.mxu0 %v436
    %456 = vmatprep.subr.bf16.mxu0 0
    %457 = vmatpush1.bf16.msra.mxu0 %v437
    %458 = vmatprep.subr.bf16.mxu0 0
    %459 = vmatpush1.bf16.msra.mxu0 %v438
    %460 = vmatprep.subr.bf16.mxu0 0
    %461 = vmatpush1.bf16.msra.mxu0 %v439
    %462 = vmatprep.subr.bf16.mxu0 0
    %463 = vmatpush1.bf16.msra.mxu0 %v440
    %464 = vmatprep.subr.bf16.mxu0 0
    %465 = vmatpush1.bf16.msra.mxu0 %v441
    %466 = vmatprep.subr.bf16.mxu0 0
    %467 = vmatpush1.bf16.msra.mxu0 0
    %468 = vmatprep.subr.bf16.mxu0 0
    %469 = vmatpush1.bf16.msra.mxu0 0
    %470 = vmatprep.subr.bf16.mxu0 0
    %471 = vmatpush1.bf16.msra.mxu0 0
    %472 = vmatprep.subr.bf16.mxu0 0
    %473 = vmatpush1.bf16.msra.mxu0 0
    %474 = vmatprep.subr.bf16.mxu0 0
    %475 = vmatpush1.bf16.msra.mxu0 0
    %476 = vmatprep.subr.bf16.mxu0 0
    %477 = vmatpush1.bf16.msra.mxu0 0
    %478 = vmatprep.subr.bf16.mxu0 0
    %479 = vmatpush1.bf16.msra.mxu0 0
    %480 = vmatprep.subr.bf16.mxu0 0
    %481 = vmatpush1.bf16.msra.mxu0 0
    %482 = vmatprep.mubr.bf16.mxu0 0
    %483 = vmatmul.mubr.bf16.gmra.mrb[0].mxu0 %v378
    %v484 = vpop.f32.mrb[0].mxu0
    %v485 = vadd.f32 %v400, %v484
    %v486 = vpop.f32.mrb[0].mxu0
    %v487 = vpop.f32.mrb[0].mxu0
    %v488 = vadd.f32 %v400, %v487
    %v489 = vpop.f32.mrb[0].mxu0
    %490 = vdwg.mxu0
    %491 = vst [vmem:[#allocation2] sm:$0xff] %v485
    %492 = vst [vmem:[#allocation2 + $0x8] sm:$0xff] %v488
    // Predicated region
    $region22: #{criss_cross_mhsa.1} parent=1 // pred_check
      _
    $region23: #{criss_cross_mhsa.1} parent=1 // pred_check_branch
      %494 = sbr.rel (0) target = $region25
    $region24: #{criss_cross_mhsa.1} parent=1 // pred_region
      %s496 = ssub.s32 256, 256
      %497 = vsyncadd [#allocation3], %s496
      %s498 = sshll.u32 [#allocation2], 4
      %s499 = int_to_ptr.vmem [resolvable:$true] %s498
      %504 = dma.vmem_to_hbm [thread:$0]  %s499, 256, %s5, [#allocation3], 128, 128, 8
    $region25: #{criss_cross_mhsa.1} parent=1 // pred_fallthru
      _
    // Predicated region
    $region26: #{criss_cross_mhsa.1} parent=1 // pred_check
      _
    $region27: #{criss_cross_mhsa.1} parent=1 // pred_check_branch
      %506 = sbr.rel (0) target = $region29
    $region28: #{criss_cross_mhsa.1} parent=1 // pred_region
      %507 = dma.done [#allocation3], 256
    $region29: #{criss_cross_mhsa.1} parent=1 // pred_fallthru
      _
    %508 = vsyncpa [#allocation3], 1

</llo_original>
